<compile_context>
chip_gen: v7x
topology: tpu7x:2x2x1
jax: 0.10.0
libtpu: 0.0.40
codegen_flags: <defaults>
</compile_context>

<pallas_src>
import functools

import jax
import jax.numpy as jnp
from jax.experimental import pallas as pl
from jax.experimental.pallas import tpu as pltpu

_LANES = 128
_SUBLANES = 8
_SMALL_N = 1 << 20          # below this element count a pad copy is negligible


def _cdiv(a: int, b: int) -> int:
    return -(-a // b)


def _round_up(a: int, b: int) -> int:
    return _cdiv(a, b) * b


def _is_v7x() -> bool:
    """True on 2-TensorCore v7x parts; conservative False otherwise."""
    try:
        return "v7" in jax.devices()[0].device_kind.lower()
    except Exception:
        return False


def _rmse_partial_kernel(t_ref, p_ref, o_ref, *, valid_rows, block_rows,
                         blocks_per_split, needs_mask):
    c = pl.program_id(0)            # reduction shard (a TensorCore on v7x)
    i = pl.program_id(1)            # position along the reduction axis

    @pl.when(i == 0)
    def _():                        # fresh (8,128) accumulator for this shard
        o_ref[...] = jnp.zeros_like(o_ref)

    # Native-dtype DMA; upcast on-chip (hidden under the HBM stream).
    d = t_ref[...].astype(jnp.float32) - p_ref[...].astype(jnp.float32)
    sq = d * d

    def _fold(x):
        # (block_rows, 128) -> (8, 128): layout-preserving reshape + pure VPU
        # adds across row-groups (no cross-lane XLU work in the hot loop).
        return jnp.sum(
            x.reshape(block_rows // _SUBLANES, _SUBLANES, _LANES), axis=0)

    if needs_mask:
        # Use the VIRTUAL block index (not the clamped DMA index) so the spare
        # iteration of an uneven core split masks its duplicate block to zero.
        start = (c * blocks_per_split + i) * block_rows
        is_full = start + block_rows <= valid_rows

        @pl.when(is_full)                       # interior blocks: no mask ops
        def _():
            o_ref[...] += _fold(sq)

        @pl.when(jnp.logical_not(is_full))      # overhanging / spare block
        def _():
            row = jax.lax.broadcasted_iota(jnp.int32, sq.shape, 0) + start
            o_ref[...] += _fold(jnp.where(row < valid_rows, sq, 0.0))
    else:
        o_ref[...] += _fold(sq)


def rmse_loss(truth, predict):
    """Pallas TPU implementation of torch RMSELoss().forward(truth, predict)."""
    assert truth.shape == predict.shape, "shapes must match (MSELoss semantics)"
    n = int(truth.size)
    assert n > 0, "RMSE of an empty tensor is undefined"

    t = truth.reshape(-1)
    p = predict.reshape(-1)

    rows_exact = n // _LANES
    lane_tail = n % _LANES
    tail_sq = jnp.float32(0.0)

    if n <= _SMALL_N and (lane_tail or rows_exact % _SUBLANES):
        # Small & ragged: zero-pad BOTH flats (identical padding contributes 0
        # to the squared-diff sum) up to a full (8k, 128) slab.  Cheap here.
        rows = max(_SUBLANES, _round_up(_cdiv(n, _LANES), _SUBLANES))
        pad = rows * _LANES - n
        t = jnp.pad(t, (0, pad))
        p = jnp.pad(p, (0, pad))
    else:
        rows = rows_exact
        if lane_tail:
            # Large & lane-unaligned: stream only the lane-aligned prefix; the
            # <128-element tail is reduced here (no full-array jnp.pad copy).
            # TODO(synk): XLA may still materialize the prefix slice once; a
            # truly zero-copy path needs a manual-DMA 1-D kernel.
            cut = rows * _LANES
            tail_sq = jnp.sum((t[cut:].astype(jnp.float32)
                               - p[cut:].astype(jnp.float32)) ** 2)
            t = t[:cut]
            p = p[:cut]

    t2 = t.reshape(rows, _LANES)
    p2 = p.reshape(rows, _LANES)

    itemsize = max(t2.dtype.itemsize, p2.dtype.itemsize)
    is_v7x = _is_v7x()

    # ~1 MiB per input block per pipeline buffer (2 MiB on v7x).
    target_block_bytes = (2 << 20) if is_v7x else (1 << 20)
    cap_rows = max(_SUBLANES,
                   (target_block_bytes // (_LANES * itemsize))
                   // _SUBLANES * _SUBLANES)
    block_rows = min(cap_rows, _round_up(rows, _SUBLANES))
    num_blocks = _cdiv(rows, block_rows)

    # Shard the reduction across the two TensorCores only on v7x.
    num_splits = 2 if (is_v7x and num_blocks >= 2) else 1
    blocks_per_split = _cdiv(num_blocks, num_splits)
    needs_mask = num_splits * blocks_per_split * block_rows > rows

    if num_splits * blocks_per_split == num_blocks:
        in_map = lambda c, i: (c * blocks_per_split + i, 0)
    else:
        # Uneven core split: clamp the spare virtual block onto the last real
        # block; its duplicate contribution is masked to zero in the kernel.
        last_blk = num_blocks - 1
        in_map = lambda c, i: (jnp.minimum(c * blocks_per_split + i, last_blk), 0)

    if num_splits == 2:
        dim_sem = (pltpu.CORE_PARALLEL, pltpu.ARBITRARY)   # real 2-TC split
    else:
        dim_sem = (pltpu.ARBITRARY, pltpu.ARBITRARY)       # size-1 lead axis

    kernel = functools.partial(
        _rmse_partial_kernel, valid_rows=rows, block_rows=block_rows,
        blocks_per_split=blocks_per_split, needs_mask=needs_mask)

    out_rows = num_splits * _SUBLANES
    in_bytes = t2.size * t2.dtype.itemsize + p2.size * p2.dtype.itemsize

    partials = pl.pallas_call(
        kernel,
        out_shape=jax.ShapeDtypeStruct((out_rows, _LANES), jnp.float32),
        grid_spec=pltpu.PrefetchScalarGridSpec(
            num_scalar_prefetch=0,
            grid=(num_splits, blocks_per_split),
            in_specs=[
                pl.BlockSpec((block_rows, _LANES), in_map),
                pl.BlockSpec((block_rows, _LANES), in_map),
            ],
            # Output block depends only on the shard index -> it stays resident
            # in VMEM across the reduction axis (the accumulator).
            out_specs=pl.BlockSpec((_SUBLANES, _LANES), lambda c, i: (c, 0)),
        ),
        compiler_params=pltpu.CompilerParams(
            dimension_semantics=dim_sem,
            vmem_limit_bytes=32 * 1024 * 1024),
        cost_estimate=pl.CostEstimate(
            flops=3 * rows * _LANES, transcendentals=0,
            bytes_accessed=in_bytes + out_rows * _LANES * 4),
    )(t2, p2)

    # Tiny finalize: sum the (num_splits*8, 128) partials, add the lane tail,
    # mean over the TRUE element count, sqrt.
    total = jnp.sum(partials, dtype=jnp.float32) + tail_sq
    return jnp.sqrt(total / jnp.float32(n))


if __name__ == "__main__":
    key = jax.random.PRNGKey(0)
    k_truth, k_pred = jax.random.split(key)

    # Small shape consistent with a typical NCHW regression target.
    shape = (2, 4, 16, 16)
    truth = jax.random.normal(k_truth, shape, dtype=jnp.float32)
    predict = jax.random.normal(k_pred, shape, dtype=jnp.float32)

    rmse = rmse_loss(truth, predict)
    jax.block_until_ready(rmse)

    # Reference check (pure JAX).
    ref = jnp.sqrt(jnp.mean((truth - predict) ** 2))
    assert jnp.allclose(rmse, ref, rtol=1e-5, atol=1e-6), (rmse, ref)

    print("KERNEL_OK")
</pallas_src>

<mosaic_0001>
module attributes {stable_mosaic.version = 11 : i64} {
  func.func @_rmse_partial_kernel(%arg0: i32, %arg1: i32, %arg2: memref<16x128xf32, #tpu.memory_space<vmem>>, %arg3: memref<16x128xf32, #tpu.memory_space<vmem>>, %arg4: memref<8x128xf32, #tpu.memory_space<vmem>>) attributes {dimension_semantics = [#tpu.dimension_semantics<arbitrary>, #tpu.dimension_semantics<arbitrary>], iteration_bounds = array<i64: 1, 1>, scalar_prefetch = 0 : i64, scratch_operands = 0 : i64, tpu.core_type = #tpu.core_type<tc>, window_params = [{transform_indices = @transform_0, window_bounds = array<i64: 16, 128>}, {transform_indices = @transform_1, window_bounds = array<i64: 16, 128>}, {transform_indices = @transform_2, window_bounds = array<i64: 8, 128>}]} {
    %c0_i32 = arith.constant 0 : i32
    %0 = arith.cmpi eq, %arg1, %c0_i32 : i32
    %1 = arith.extui %0 : i1 to i32
    %c0_i32_0 = arith.constant 0 : i32
    %2 = arith.cmpi ne, %1, %c0_i32_0 : i32
    scf.if %2 {
      %cst_8 = arith.constant 0.000000e+00 : f32
      %12 = vector.broadcast %cst_8 : f32 to vector<8x128xf32>
      %c0_9 = arith.constant 0 : index
      %c0_10 = arith.constant 0 : index
      %13 = vector.load %arg4[%c0_9, %c0_10] : memref<8x128xf32, #tpu.memory_space<vmem>>, vector<8x128xf32>
      tpu.vector_store %arg4[%c0_9, %c0_10], %12 {strides = array<i32>} : memref<8x128xf32, #tpu.memory_space<vmem>>, vector<8x128xf32>,
    } else {
    }
    %c0 = arith.constant 0 : index
    %c0_1 = arith.constant 0 : index
    %3 = vector.load %arg2[%c0, %c0_1] : memref<16x128xf32, #tpu.memory_space<vmem>>, vector<16x128xf32>
    %c0_2 = arith.constant 0 : index
    %c0_3 = arith.constant 0 : index
    %4 = vector.load %arg3[%c0_2, %c0_3] : memref<16x128xf32, #tpu.memory_space<vmem>>, vector<16x128xf32>
    %5 = arith.subf %3, %4 : vector<16x128xf32>
    %6 = arith.mulf %5, %5 : vector<16x128xf32>
    %c0_4 = arith.constant 0 : index
    %c0_5 = arith.constant 0 : index
    %7 = vector.load %arg4[%c0_4, %c0_5] : memref<8x128xf32, #tpu.memory_space<vmem>>, vector<8x128xf32>
    %8 = vector.shape_cast %6 : vector<16x128xf32> to vector<2x8x128xf32>
    %cst = arith.constant dense<0.000000e+00> : vector<8x128xf32>
    %9 = vector.multi_reduction <add>, %8, %cst [0] : vector<2x8x128xf32> to vector<8x128xf32>
    %10 = arith.addf %7, %9 : vector<8x128xf32>
    %c0_6 = arith.constant 0 : index
    %c0_7 = arith.constant 0 : index
    %11 = vector.load %arg4[%c0_6, %c0_7] : memref<8x128xf32, #tpu.memory_space<vmem>>, vector<8x128xf32>
    tpu.vector_store %arg4[%c0_6, %c0_7], %10 {strides = array<i32>} : memref<8x128xf32, #tpu.memory_space<vmem>>, vector<8x128xf32>,
    return
  }
  func.func @transform_0(%arg0: i32, %arg1: i32) -> (i32, i32) {
    %c1_i32 = arith.constant 1 : i32
    %0 = arith.muli %arg0, %c1_i32 : i32
    %1 = arith.addi %0, %arg1 : i32
    %c0_i32 = arith.constant 0 : i32
    %c0_i32_0 = arith.constant 0 : i32
    return %1, %c0_i32 : i32, i32
  }
  func.func @transform_1(%arg0: i32, %arg1: i32) -> (i32, i32) {
    %c1_i32 = arith.constant 1 : i32
    %0 = arith.muli %arg0, %c1_i32 : i32
    %1 = arith.addi %0, %arg1 : i32
    %c0_i32 = arith.constant 0 : i32
    %c0_i32_0 = arith.constant 0 : i32
    return %1, %c0_i32 : i32, i32
  }
  func.func @transform_2(%arg0: i32, %arg1: i32) -> (i32, i32) {
    %c0_i32 = arith.constant 0 : i32
    %c0_i32_0 = arith.constant 0 : i32
    return %arg0, %c0_i32 : i32, i32
  }
}

</mosaic_0001>

<llo_original>
// kernel: tpu_custom_call.1
$region0: #{tpu_custom_call.1}
  #allocation0 [shape = 'u32[]', space=smem, size = 0x4, offset = 0x4, fixed_abs, tag = 'smem constant byte address 0x4 - core index']
  #allocation1 [shape = 'u32[144,128]{1,0:T(1,128)}', space=vmem, size = 0x12000, scoped, tag = 'internal scratch']
  %s0 = inlined_call_operand.hbm [shape: f32[16,128], index: 0, kind: input, shape index: {}]
  %s1 = inlined_call_operand.hbm [shape: f32[16,128], index: 1, kind: input, shape index: {}]
  %s2 = inlined_call_operand.hbm [shape: f32[8,128], index: 2, kind: output, shape index: {}]
  %s3 = sld [smem:[#allocation0]]
  $region30: #{tpu_custom_call.1} parent=0
    _
  %s5 = ssub.s32 1, %s3
  %s6 = scalar_select 0, %s5, %s3
  $region1: #{tpu_custom_call.1} parent=0
    #allocation2 [shape = 'u8[8192]{0}', space=vmem, size = 0x2000, scoped, tag = 'input window, operand 0, single buffered']
    #allocation3 [shape = 's32[1]{0}', space=sflag, size = 0x4, scoped, tag = 'scoped memory for tpu_custom_call.1']
    #allocation4 [shape = 's32[1]{0}', space=sflag, size = 0x4, scoped, tag = 'scoped memory for tpu_custom_call.1']
    #allocation5 [shape = 'u8[8192]{0}', space=vmem, size = 0x2000, scoped, tag = 'input window, operand 1, single buffered']
    #allocation6 [shape = 's32[1]{0}', space=sflag, size = 0x4, scoped, tag = 'scoped memory for tpu_custom_call.1']
    #allocation7 [shape = 'u8[4096]{0}', space=vmem, size = 0x1000, scoped, tag = 'output window, operand 0, single buffered']
    %7 = vsyncpa [#allocation3], 0
    %8 = vsyncpa [#allocation6], 0
    %9 = vsyncpa [#allocation4], 0
    // Predicated region
    $region2: #{tpu_custom_call.1} parent=1 // pred_check
      _
    $region3: #{tpu_custom_call.1} parent=1 // pred_check_branch
      %11 = sbr.rel (0) target = $region5
    $region4: #{tpu_custom_call.1} parent=1 // pred_region
      %s12 = sadd.s32 0, 0
      %s13 = smul.u32 2, %s12
      %s15 = ssub.s32 256, 256
      %16 = vsyncadd [#allocation3], %s15
      %s17 = smul.addr %s13, 128
      %s18 = scalar_lea.hbm %s0, %s17
      %s19 = sshll.u32 [#allocation2], 4
      %s20 = int_to_ptr.vmem [resolvable:$true] %s19
      %25 = dma.hbm_to_vmem [thread:$0]  %s18, 256, %s20, [#allocation3], 128, 128, 8
    $region5: #{tpu_custom_call.1} parent=1 // pred_fallthru
      _
    // Predicated region
    $region6: #{tpu_custom_call.1} parent=1 // pred_check
      _
    $region7: #{tpu_custom_call.1} parent=1 // pred_check_branch
      %27 = sbr.rel (0) target = $region9
    $region8: #{tpu_custom_call.1} parent=1 // pred_region
      %s28 = sadd.s32 0, 0
      %s29 = smul.u32 2, %s28
      %s31 = ssub.s32 256, 256
      %32 = vsyncadd [#allocation6], %s31
      %s33 = smul.addr %s29, 128
      %s34 = scalar_lea.hbm %s1, %s33
      %s35 = sshll.u32 [#allocation5], 4
      %s36 = int_to_ptr.vmem [resolvable:$true] %s35
      %41 = dma.hbm_to_vmem [thread:$0]  %s34, 256, %s36, [#allocation6], 128, 128, 8
    $region9: #{tpu_custom_call.1} parent=1 // pred_fallthru
      _
    // Predicated region
    $region10: #{tpu_custom_call.1} parent=1 // pred_check
      _
    $region11: #{tpu_custom_call.1} parent=1 // pred_check_branch
      %43 = sbr.rel (0) target = $region13
    $region12: #{tpu_custom_call.1} parent=1 // pred_region
      %44 = dma.done [#allocation3], 256
    $region13: #{tpu_custom_call.1} parent=1 // pred_fallthru
      _
    // Predicated region
    $region14: #{tpu_custom_call.1} parent=1 // pred_check
      _
    $region15: #{tpu_custom_call.1} parent=1 // pred_check_branch
      %46 = sbr.rel (0) target = $region17
    $region16: #{tpu_custom_call.1} parent=1 // pred_region
      %47 = dma.done [#allocation6], 256
    $region17: #{tpu_custom_call.1} parent=1 // pred_fallthru
      _
    %s48 = sadd.s32 0, 0
    %s49 = smul.u32 2, %s48
    %s50 = sadd.s32 0, 0
    %s51 = smul.u32 2, %s50
    %p52 = scmp.eq.s32.totalorder 0, 0
    // Predicated region
    $region18: #{tpu_custom_call.1} parent=1 // pred_check
      %p53 = pneg %p52
    $region19: #{tpu_custom_call.1} parent=1 // pred_check_branch
      %55 = sbr.rel (%p53) target = $region21
    $region20: #{tpu_custom_call.1} parent=1 // pred_region
      %56 = vst [vmem:[#allocation7] sm:$0xff] 0.0
    $region21: #{tpu_custom_call.1} parent=1 // pred_fallthru
      _
    %v57 = vld [vmem:[#allocation2] sm:$0xff]
    %v58 = vld [vmem:[#allocation2 + $0x8] sm:$0xff]
    %v59 = vld [vmem:[#allocation5] sm:$0xff]
    %v60 = vld [vmem:[#allocation5 + $0x8] sm:$0xff]
    %v61 = vsub.f32 %v57, %v59
    %v62 = vsub.f32 %v58, %v60
    %v63 = vmul.f32 %v61, %v61
    %v64 = vmul.f32 %v62, %v62
    %v65 = vld [vmem:[#allocation7] sm:$0xff]
    %v66 = vadd.f32 %v63, %v64
    %v67 = vadd.f32 %v65, %v66
    %68 = vst [vmem:[#allocation7] sm:$0xff] %v67
    // Predicated region
    $region22: #{tpu_custom_call.1} parent=1 // pred_check
      _
    $region23: #{tpu_custom_call.1} parent=1 // pred_check_branch
      %70 = sbr.rel (0) target = $region25
    $region24: #{tpu_custom_call.1} parent=1 // pred_region
      %s72 = ssub.s32 128, 128
      %73 = vsyncadd [#allocation4], %s72
      %s75 = sshll.u32 [#allocation7], 4
      %s76 = int_to_ptr.vmem [resolvable:$true] %s75
      %78 = dma.vmem_to_hbm [thread:$0]  %s76, 128, %s2, [#allocation4]
    $region25: #{tpu_custom_call.1} parent=1 // pred_fallthru
      _
    // Predicated region
    $region26: #{tpu_custom_call.1} parent=1 // pred_check
      _
    $region27: #{tpu_custom_call.1} parent=1 // pred_check_branch
      %80 = sbr.rel (0) target = $region29
    $region28: #{tpu_custom_call.1} parent=1 // pred_region
      %81 = dma.done [#allocation4], 128
    $region29: #{tpu_custom_call.1} parent=1 // pred_fallthru
      _
    %82 = vsyncpa [#allocation3], 1
    %83 = vsyncpa [#allocation6], 1
    %84 = vsyncpa [#allocation4], 1

</llo_original>
